<compile_context>
chip_gen: v7x
topology: tpu7x:2x2x1
jax: 0.10.0
libtpu: 0.0.40
codegen_flags: <defaults>
</compile_context>

<pallas_src>
from functools import partial

import jax
import jax.numpy as jnp
from jax.experimental import pallas as pl
from jax.experimental.pallas import tpu as pltpu


def _scale_bias_kernel(x_ref, scale_ref, bias_ref, o_ref, *, rpb, cpb, scale_axis):
    """out = x * scale + bias.

    x_ref / o_ref : (rpb, cpb) VMEM tiles.
    scale_ref / bias_ref : full resident arrays, either (padded_rows, 1)
    (scale_axis == 0, per-row constants) or (1, padded_cols) (scale_axis == 1,
    per-column constants); the current slab is selected with pl.ds.
    """
    if scale_axis == 0:
        r0 = pl.multiple_of(pl.program_id(0) * rpb, rpb)
        s = scale_ref[pl.ds(r0, rpb), :]
        b = bias_ref[pl.ds(r0, rpb), :]
    else:
        c0 = pl.multiple_of(pl.program_id(1) * cpb, cpb)
        s = scale_ref[:, pl.ds(c0, cpb)]
        b = bias_ref[:, pl.ds(c0, cpb)]
    o_ref[...] = x_ref[...] * s + b


def _sublane_multiple(dtype):
    # f32 -> 8, bf16 -> 16, int8/fp8 -> 32 (native packed-tile sublane count).
    itemsize = jnp.dtype(dtype).itemsize
    return max(8, 32 // itemsize)


def _block_sizes(rows, cols, itemsize, sub, target_block_bytes, max_block_bytes):
    """Pick (rows_per_block, cols_per_block) under the VMEM budget."""
    target = max(itemsize * sub * 128, min(target_block_bytes, max_block_bytes))

    # Column tiling only if even a minimum-height slab would blow the budget.
    if sub * cols * itemsize > target:
        lane_budget = max(128, (target // (sub * itemsize)) // 128 * 128)
        cpb = min(lane_budget, cols)          # multiple of 128 by construction
    else:
        cpb = cols                            # full-row (lane-dense) blocks

    rows_budget = max(1, target // (cpb * itemsize))
    rpb = max(sub, (rows_budget // sub) * sub)

    if rpb >= rows:
        if rows >= 2 * sub:
            # v7x: keep both TensorCores busy -> at least 2 row-blocks.
            rpb = max(sub, pl.cdiv(pl.cdiv(rows, 2), sub) * sub)
        else:
            rpb = rows                        # single block == full extent (legal)
    return rpb, cpb


def _pad_rows(a, padded_rows, fill):
    rows = a.shape[0]
    if padded_rows == rows:
        return a
    pad = jnp.full((padded_rows - rows, a.shape[1]), fill, a.dtype)
    return jnp.concatenate([a, pad], axis=0)


def _pad_cols(a, padded_cols, fill):
    cols = a.shape[1]
    if padded_cols == cols:
        return a
    pad = jnp.full((a.shape[0], padded_cols - cols), fill, a.dtype)
    return jnp.concatenate([a, pad], axis=1)


def normalize(x, mean, std, *, target_block_bytes=8 << 20, donate_x=False):
    """Per-channel (x - mean) / std over NCHW as a lane-dense scale+bias kernel."""
    N, C, H, W = x.shape
    hw = H * W
    itemsize = jnp.dtype(x.dtype).itemsize
    sub = _sublane_multiple(x.dtype)

    # scale/bias in float32, cast only the final arrays to x.dtype.
    inv_std = 1.0 / std.astype(jnp.float32)                 # (C,)
    scale_c = inv_std                                        # (C,)
    bias_c = -mean.astype(jnp.float32) * inv_std             # (C,)

    if hw >= 128 and hw % 128 == 0:
        # Main path: one row per (n, c) plane; per-row scale/bias.
        rows, cols, scale_axis = N * C, hw, 0
        x2 = x.reshape(rows, cols)
        scale2 = jnp.tile(scale_c, N).reshape(rows, 1).astype(x.dtype)
        bias2 = jnp.tile(bias_c, N).reshape(rows, 1).astype(x.dtype)
    else:
        # Small-plane fallback: keep the lane axis wide (C*H*W); per-column consts.
        rows, cols, scale_axis = N, C * hw, 1
        x2 = x.reshape(rows, cols)
        scale2 = jnp.repeat(scale_c, hw).reshape(1, cols).astype(x.dtype)
        bias2 = jnp.repeat(bias_c, hw).reshape(1, cols).astype(x.dtype)

    # VMEM budget: double-buffered in + out ~= 4x block must fit with headroom.
    vmem_limit_bytes = 48 << 20
    max_block_bytes = int(0.75 * vmem_limit_bytes) // 4
    rpb, cpb = _block_sizes(rows, cols, itemsize, sub, target_block_bytes,
                            max_block_bytes)

    grid = (pl.cdiv(rows, rpb), pl.cdiv(cols, cpb))

    # scale/bias stay fully VMEM-resident; pad so in-kernel pl.ds never goes OOB.
    if scale_axis == 0:
        padded = grid[0] * rpb
        scale2 = _pad_rows(scale2, padded, 1.0)
        bias2 = _pad_rows(bias2, padded, 0.0)
        sb_block = (padded, 1)
    else:
        padded = grid[1] * cpb
        scale2 = _pad_cols(scale2, padded, 1.0)
        bias2 = _pad_cols(bias2, padded, 0.0)
        sb_block = (1, padded)

    kernel = partial(_scale_bias_kernel, rpb=rpb, cpb=cpb, scale_axis=scale_axis)

    cost = pl.CostEstimate(
        flops=2 * rows * cols,
        transcendentals=0,
        bytes_accessed=2 * rows * cols * itemsize
        + 2 * scale2.size * jnp.dtype(scale2.dtype).itemsize,
    )

    out2 = pl.pallas_call(
        kernel,
        out_shape=jax.ShapeDtypeStruct((rows, cols), x.dtype),
        grid=grid,
        in_specs=[
            pl.BlockSpec((rpb, cpb), lambda i, j: (i, j)),     # x tiles
            pl.BlockSpec(sb_block, lambda i, j: (0, 0)),       # scale (resident)
            pl.BlockSpec(sb_block, lambda i, j: (0, 0)),       # bias  (resident)
        ],
        out_specs=pl.BlockSpec((rpb, cpb), lambda i, j: (i, j)),
        compiler_params=pltpu.CompilerParams(
            dimension_semantics=("parallel", "parallel"),      # megacore sharding
            vmem_limit_bytes=vmem_limit_bytes,
        ),
        cost_estimate=cost,
        input_output_aliases=({0: 0} if donate_x else {}),
        )(x2, scale2, bias2)

    return out2.reshape(N, C, H, W)


if __name__ == "__main__":
    # Deterministic parameters as in the PyTorch module's __init__ (3 channels).
    mean = jnp.array([0.5, 0.5, 0.5], dtype=jnp.float32)
    std = jnp.array([0.5, 0.5, 0.5], dtype=jnp.float32)

    key = jax.random.PRNGKey(0)
    x = jax.random.uniform(key, (2, 3, 16, 16), dtype=jnp.float32)

    out = normalize(x, mean, std)
    out = jax.block_until_ready(out)

    # Reference in plain JAX (identical broadcast semantics to the PyTorch module).
    ref = (x - mean.reshape(1, -1, 1, 1)) / std.reshape(1, -1, 1, 1)
    assert jnp.allclose(out, ref, atol=1e-6), "mismatch vs reference"

    print("KERNEL_OK")
</pallas_src>

<mosaic_0001>
module attributes {stable_mosaic.version = 11 : i64} {
  func.func @_scale_bias_kernel(%arg0: i32, %arg1: i32, %arg2: memref<6x256xf32, #tpu.memory_space<vmem>>, %arg3: memref<6x1xf32, #tpu.memory_space<vmem>>, %arg4: memref<6x1xf32, #tpu.memory_space<vmem>>, %arg5: memref<6x256xf32, #tpu.memory_space<vmem>>) attributes {dimension_semantics = [#tpu.dimension_semantics<parallel>, #tpu.dimension_semantics<parallel>], iteration_bounds = array<i64: 1, 1>, scalar_prefetch = 0 : i64, scratch_operands = 0 : i64, tpu.core_type = #tpu.core_type<tc>, window_params = [{transform_indices = @transform_0, window_bounds = array<i64: 6, 256>}, {pipeline_mode = #tpu.pipeline_mode<synchronous>, transform_indices = @transform_1, window_bounds = array<i64: 6, 1>}, {pipeline_mode = #tpu.pipeline_mode<synchronous>, transform_indices = @transform_2, window_bounds = array<i64: 6, 1>}, {transform_indices = @transform_3, window_bounds = array<i64: 6, 256>}]} {
    %c6_i32 = arith.constant 6 : i32
    %0 = arith.muli %arg0, %c6_i32 : i32
    %1 = tpu.assume_multiple %0, 6 : i32
    %2 = arith.index_cast %1 : i32 to index
    %c0 = arith.constant 0 : index
    %3 = vector.load %arg3[%2, %c0] : memref<6x1xf32, #tpu.memory_space<vmem>>, vector<6x1xf32>
    %4 = arith.index_cast %1 : i32 to index
    %c0_0 = arith.constant 0 : index
    %5 = vector.load %arg4[%4, %c0_0] : memref<6x1xf32, #tpu.memory_space<vmem>>, vector<6x1xf32>
    %c0_1 = arith.constant 0 : index
    %c0_2 = arith.constant 0 : index
    %6 = vector.load %arg2[%c0_1, %c0_2] : memref<6x256xf32, #tpu.memory_space<vmem>>, vector<6x256xf32>
    %7 = vector.broadcast %3 : vector<6x1xf32> to vector<6x256xf32>
    %8 = arith.mulf %6, %7 : vector<6x256xf32>
    %9 = vector.broadcast %5 : vector<6x1xf32> to vector<6x256xf32>
    %10 = arith.addf %8, %9 : vector<6x256xf32>
    %c0_3 = arith.constant 0 : index
    %c0_4 = arith.constant 0 : index
    %11 = vector.load %arg5[%c0_3, %c0_4] : memref<6x256xf32, #tpu.memory_space<vmem>>, vector<6x256xf32>
    tpu.vector_store %arg5[%c0_3, %c0_4], %10 {strides = array<i32>} : memref<6x256xf32, #tpu.memory_space<vmem>>, vector<6x256xf32>,
    return
  }
  func.func @transform_0(%arg0: i32, %arg1: i32) -> (i32, i32) {
    %c0_i32 = arith.constant 0 : i32
    return %arg0, %arg1 : i32, i32
  }
  func.func @transform_1(%arg0: i32, %arg1: i32) -> (i32, i32) {
    %c0_i32 = arith.constant 0 : i32
    %c0_i32_0 = arith.constant 0 : i32
    %c0_i32_1 = arith.constant 0 : i32
    return %c0_i32, %c0_i32_0 : i32, i32
  }
  func.func @transform_2(%arg0: i32, %arg1: i32) -> (i32, i32) {
    %c0_i32 = arith.constant 0 : i32
    %c0_i32_0 = arith.constant 0 : i32
    %c0_i32_1 = arith.constant 0 : i32
    return %c0_i32, %c0_i32_0 : i32, i32
  }
  func.func @transform_3(%arg0: i32, %arg1: i32) -> (i32, i32) {
    %c0_i32 = arith.constant 0 : i32
    return %arg0, %arg1 : i32, i32
  }
}

</mosaic_0001>

<llo_original>
// kernel: tpu_custom_call.1
$region0: #{tpu_custom_call.1}
  #allocation0 [shape = 'u32[]', space=smem, size = 0x4, offset = 0x4, fixed_abs, tag = 'smem constant byte address 0x4 - core index']
  #allocation1 [shape = 'u32[144,128]{1,0:T(1,128)}', space=vmem, size = 0x12000, scoped, tag = 'internal scratch']
  %s0 = inlined_call_operand.vmem [shape: f32[6,256], index: 0, kind: input, shape index: {}]
  %s1 = inlined_call_operand.vmem [shape: f32[6,1], index: 1, kind: input, shape index: {}]
  %s2 = inlined_call_operand.vmem [shape: f32[6,1], index: 2, kind: input, shape index: {}]
  %s3 = inlined_call_operand.hbm [shape: f32[6,256], index: 3, kind: output, shape index: {}]
  %s4 = sld [smem:[#allocation0]]
  $region22: #{tpu_custom_call.1} parent=0
    _
  %s6 = ssub.s32 1, %s4
  %s7 = scalar_select 0, %s6, %s4
  $region1: #{tpu_custom_call.1} parent=0
    #allocation2 [shape = 'u8[8192]{0}', space=vmem, size = 0x2000, scoped, tag = 'output window, operand 0, single buffered']
    #allocation3 [shape = 's32[1]{0}', space=sflag, size = 0x4, scoped, tag = 'scoped memory for tpu_custom_call.1']
    %8 = vsyncpa [#allocation3], 0
    // Predicated region
    $region2: #{tpu_custom_call.1} parent=1 // pred_check
      _
    $region3: #{tpu_custom_call.1} parent=1 // pred_check_branch
      %10 = sbr.rel (0) target = $region5
    $region4: #{tpu_custom_call.1} parent=1 // pred_region
      _
    $region5: #{tpu_custom_call.1} parent=1 // pred_fallthru
      _
    // Predicated region
    $region6: #{tpu_custom_call.1} parent=1 // pred_check
      _
    $region7: #{tpu_custom_call.1} parent=1 // pred_check_branch
      %12 = sbr.rel (0) target = $region9
    $region8: #{tpu_custom_call.1} parent=1 // pred_region
      _
    $region9: #{tpu_custom_call.1} parent=1 // pred_fallthru
      _
    // Predicated region
    $region10: #{tpu_custom_call.1} parent=1 // pred_check
      _
    $region11: #{tpu_custom_call.1} parent=1 // pred_check_branch
      %14 = sbr.rel (0) target = $region13
    $region12: #{tpu_custom_call.1} parent=1 // pred_region
      _
    $region13: #{tpu_custom_call.1} parent=1 // pred_fallthru
      _
    %s15 = smul.u32 0, 6
    %s16 = scalar_lea.vmem %s1, %s15
    %v17 = vld [vmem:[%s16] sm:$0x3f]
    %s18 = scalar_lea.vmem %s2, %s15
    %v19 = vld [vmem:[%s18] sm:$0x3f]
    %v20 = vld [vmem:[%s0] sm:$0x3f]
    %v21 = vld [vmem:[%s0 + $0x8] sm:$0x3f]
    %23 = vset.pattern.permute.xlu0 0
    %24 = vperm.xlu0 %23, %v17
    %v25 = vpop.permute.xlu0 %24
    %v27 = vmul.f32 %v20, %v25
    %v28 = vmul.f32 %v21, %v25
    %30 = vset.pattern.permute.xlu0 0
    %31 = vperm.xlu0 %30, %v19
    %v32 = vpop.permute.xlu0 %31
    %v34 = vadd.f32 %v27, %v32
    %v35 = vadd.f32 %v28, %v32
    %36 = vst [vmem:[#allocation2] sm:$0x3f] %v34
    %37 = vst [vmem:[#allocation2 + $0x8] sm:$0x3f] %v35
    // Predicated region
    $region14: #{tpu_custom_call.1} parent=1 // pred_check
      _
    $region15: #{tpu_custom_call.1} parent=1 // pred_check_branch
      %39 = sbr.rel (0) target = $region17
    $region16: #{tpu_custom_call.1} parent=1 // pred_region
      %s41 = ssub.s32 256, 256
      %42 = vsyncadd [#allocation3], %s41
      %s44 = sshll.u32 [#allocation2], 4
      %s45 = int_to_ptr.vmem [resolvable:$true] %s44
      %47 = dma.vmem_to_hbm [thread:$0]  %s45, 256, %s3, [#allocation3]
    $region17: #{tpu_custom_call.1} parent=1 // pred_fallthru
      _
    // Predicated region
    $region18: #{tpu_custom_call.1} parent=1 // pred_check
      _
    $region19: #{tpu_custom_call.1} parent=1 // pred_check_branch
      %49 = sbr.rel (0) target = $region21
    $region20: #{tpu_custom_call.1} parent=1 // pred_region
      %50 = dma.done [#allocation3], 256
    $region21: #{tpu_custom_call.1} parent=1 // pred_fallthru
      _
    %51 = vsyncpa [#allocation3], 1

</llo_original>
